<compile_context>
chip_gen: v6e
topology: v6e:2x2x1
jax: 0.10.0
libtpu: 0.0.40
codegen_flags: <defaults>
</compile_context>

<pallas_src>
import functools

import jax
import jax.numpy as jnp
from jax import lax
from jax.experimental import pallas as pl
from jax.experimental.pallas import tpu as pltpu


def _round_up(a, b):
    return ((a + b - 1) // b) * b


def _choose_tiling(rbase, tm):
    """Pick (tile_rows, padded_rows); prefer tiles that divide rbase exactly
    so the wrapper never has to slice (copy) the padded output."""
    rpad8 = _round_up(rbase, 8)
    if rbase % 8 == 0:
        t = min(tm, rbase)
        t -= t % 8
        while t >= 8 and rbase % t:
            t -= 8
        if t >= 8 and (t >= 256 or t == min(tm, rbase)):
            return t, rbase                      # no padding needed
    # Fallback: pad rows up to a multiple of the tile (wrapper slices after).
    t = max(8, min(tm, rpad8) - (min(tm, rpad8) % 8))
    return t, _round_up(rbase, t)


def _hash_u24(x):
    """Thomas Mueller 32-bit integer hash in int32 arithmetic (arithmetic
    shifts masked to emulate logical shifts); returns 24 uniform bits."""
    x = (((x >> 16) & 0xFFFF) ^ x) * 0x45D9F3B
    x = (((x >> 16) & 0xFFFF) ^ x) * 0x45D9F3B
    x = ((x >> 16) & 0xFFFF) ^ x
    return x & 0x00FFFFFF


def _hall_kernel(seed_ref, x_ref, w1_ref, b1_ref, w2_ref, b2_ref, o_ref, *,
                 tm, h, rpad):
    # seed_ref : SMEM (1,) int32        x_ref : (TM, H) bf16
    # w1_ref   : (2H, H) bf16           b1_ref: (1, H) f32
    # w2_ref   : (H, H) bf16            b2_ref: (1, H) f32
    # o_ref    : (TM, H) bf16
    i = pl.program_id(0)                 # row tile of the base x
    j = pl.program_id(1)                 # replica index (0..m-1)

    # ---- in-kernel uniform noise (counter-based hash; portable VPU ops) ----
    base = (j * rpad + i * tm) * h                       # global element offset
    rows = lax.broadcasted_iota(jnp.int32, (tm, h), 0)
    cols = lax.broadcasted_iota(jnp.int32, (tm, h), 1)
    ctr = base + rows * h + cols + seed_ref[0] * 0x61C88647   # wraps mod 2^32
    bits24 = _hash_u24(ctr)
    # 24 exact-in-f32 bits -> U[0,1); cast to bf16 for the MXU.
    noise = bits24.astype(jnp.float32) * jnp.float32(1.0 / (1 << 24))

    # cat([seed, noise], -1) @ W1 as ONE K=2H matmul (f32 accumulation).
    lhs = jnp.concatenate([x_ref[...], noise.astype(jnp.bfloat16)], axis=-1)
    h1 = jnp.dot(lhs, w1_ref[...], preferred_element_type=jnp.float32)
    h1 = jnp.maximum(h1 + b1_ref[...], 0.0)              # Linear1 + ReLU (f32)

    o = jnp.dot(h1.astype(jnp.bfloat16), w2_ref[...],
                preferred_element_type=jnp.float32)
    o_ref[...] = jnp.maximum(o + b2_ref[...], 0.0).astype(o_ref.dtype)


@functools.partial(jax.jit, static_argnames=("m", "tm"))
def hallucinator_forward(x, w1, b1, w2, b2, seed, *, m, tm=1024):
    """x: (B, S, H) -> (m*B, S, H) bf16. w1: (2H, H), w2: (H, H), b1/b2: (1, H)."""
    B, S, H = x.shape
    Rbase = B * S
    tm_eff, Rpad = _choose_tiling(Rbase, tm)
    nrt = Rpad // tm_eff                       # row tiles of the base x

    x2d = x.reshape(Rbase, H).astype(jnp.bfloat16)
    if Rpad != Rbase:
        x2d = jnp.pad(x2d, ((0, Rpad - Rbase), (0, 0)))

    w1b = w1.astype(jnp.bfloat16)              # full (2H, H): seed half + noise half
    w2b = w2.astype(jnp.bfloat16)
    b1r = b1.reshape(1, H).astype(jnp.float32)
    b2r = b2.reshape(1, H).astype(jnp.float32)
    seed_arr = jnp.asarray(seed, dtype=jnp.int32).reshape((1,))

    kernel = functools.partial(_hall_kernel, tm=tm_eff, h=H, rpad=Rpad)

    out2d = pl.pallas_call(
        kernel,
        out_shape=jax.ShapeDtypeStruct((m * Rpad, H), jnp.bfloat16),
        grid_spec=pltpu.PrefetchScalarGridSpec(
            num_scalar_prefetch=1,             # PRNG seed lands in SMEM
            grid=(nrt, m),                     # inner axis m: x tile stays resident
            in_specs=[
                pl.BlockSpec((tm_eff, H), lambda i, j, *_: (i, 0)),   # x (resident over m)
                pl.BlockSpec((2 * H, H), lambda i, j, *_: (0, 0)),    # W1 (resident)
                pl.BlockSpec((1, H), lambda i, j, *_: (0, 0)),        # b1
                pl.BlockSpec((H, H), lambda i, j, *_: (0, 0)),        # W2 (resident)
                pl.BlockSpec((1, H), lambda i, j, *_: (0, 0)),        # b2
            ],
            out_specs=pl.BlockSpec((tm_eff, H), lambda i, j, *_: (j * nrt + i, 0)),
        ),
        compiler_params=pltpu.CompilerParams(
            dimension_semantics=("parallel", "parallel"),
            vmem_limit_bytes=32 * 1024 * 1024,
        ),
    )(seed_arr, x2d, w1b, b1r, w2b, b2r)

    out = out2d.reshape(m, Rpad, H)
    if Rpad != Rbase:                          # only pay the slice copy if we had to pad
        out = out[:, :Rbase, :]
    return out.reshape(m * B, S, H)


def init_params(key, hid_dim):
    """Mimics nn.Linear default init (uniform(-1/sqrt(fan_in), 1/sqrt(fan_in)))."""
    k1, k2, k3, k4 = jax.random.split(key, 4)
    fan1, fan2 = 2 * hid_dim, hid_dim
    w1 = jax.random.uniform(k1, (2 * hid_dim, hid_dim), jnp.float32,
                            -1.0 / jnp.sqrt(fan1), 1.0 / jnp.sqrt(fan1))
    b1 = jax.random.uniform(k2, (1, hid_dim), jnp.float32,
                            -1.0 / jnp.sqrt(fan1), 1.0 / jnp.sqrt(fan1))
    w2 = jax.random.uniform(k3, (hid_dim, hid_dim), jnp.float32,
                            -1.0 / jnp.sqrt(fan2), 1.0 / jnp.sqrt(fan2))
    b2 = jax.random.uniform(k4, (1, hid_dim), jnp.float32,
                            -1.0 / jnp.sqrt(fan2), 1.0 / jnp.sqrt(fan2))
    return w1, b1, w2, b2


if __name__ == "__main__":
    # Small, lane-aligned shapes consistent with the module's forward.
    m = 4
    hid_dim = 128
    B, S = 2, 8

    root = jax.random.PRNGKey(0)
    k_x, k_p = jax.random.split(root, 2)

    x = jax.random.normal(k_x, (B, S, hid_dim), dtype=jnp.float32)
    w1, b1, w2, b2 = init_params(k_p, hid_dim)
    seed = jnp.array([1234], dtype=jnp.int32)

    out = hallucinator_forward(x, w1, b1, w2, b2, seed, m=m)
    jax.block_until_ready(out)

    # --- correctness checks -------------------------------------------------
    assert out.shape == (m * B, S, hid_dim)
    assert out.dtype == jnp.bfloat16            # kernel emits bf16 (mem-bound output)
    assert bool(jnp.all(out.astype(jnp.float32) >= 0.0))        # ReLU output

    # 1) Deterministic path: zero the noise half of W1 so the in-kernel noise
    #    contributes nothing; kernel must match a bf16-matched pure-JAX
    #    reference, identical across all m replicas.
    #    (torch.rand_like's exact RNG stream cannot be reproduced; the noisy
    #     path is checked statistically below.)
    w1_det = w1.at[hid_dim:].set(0.0)
    out_det = hallucinator_forward(x, w1_det, b1, w2, b2, seed, m=m)
    xb = x.reshape(B * S, hid_dim).astype(jnp.bfloat16)
    h_ref = jnp.maximum(
        jnp.dot(xb, w1[:hid_dim].astype(jnp.bfloat16),
                preferred_element_type=jnp.float32) + b1, 0.0)
    r_ref = jnp.maximum(
        jnp.dot(h_ref.astype(jnp.bfloat16), w2.astype(jnp.bfloat16),
                preferred_element_type=jnp.float32) + b2, 0.0)
    ref = jnp.tile(r_ref.reshape(B, S, hid_dim), (m, 1, 1))
    assert jnp.allclose(out_det.astype(jnp.float32), ref, atol=2e-2, rtol=2e-2)

    # 2) With the real weights the noise is injected and varies per replica.
    outf = out.astype(jnp.float32)
    assert bool(jnp.any(jnp.abs(outf - jnp.tile(outf[:B], (m, 1, 1))) > 1e-3))
    assert bool(jnp.any(jnp.abs(outf - out_det.astype(jnp.float32)) > 1e-3))

    print("KERNEL_OK")
</pallas_src>

<mosaic_0001>
module attributes {stable_mosaic.version = 11 : i64} {
  func.func @_hall_kernel(%arg0: i32, %arg1: i32, %arg2: memref<1xi32, #tpu.memory_space<smem>>, %arg3: memref<16x128xbf16, #tpu.memory_space<vmem>>, %arg4: memref<256x128xbf16, #tpu.memory_space<vmem>>, %arg5: memref<1x128xf32, #tpu.memory_space<vmem>>, %arg6: memref<128x128xbf16, #tpu.memory_space<vmem>>, %arg7: memref<1x128xf32, #tpu.memory_space<vmem>>, %arg8: memref<16x128xbf16, #tpu.memory_space<vmem>>) attributes {dimension_semantics = [#tpu.dimension_semantics<parallel>, #tpu.dimension_semantics<parallel>], iteration_bounds = array<i64: 1, 4>, scalar_prefetch = 1 : i64, scratch_operands = 0 : i64, tpu.core_type = #tpu.core_type<tc>, window_params = [{transform_indices = @transform_0, window_bounds = array<i64: 16, 128>}, {pipeline_mode = #tpu.pipeline_mode<synchronous>, transform_indices = @transform_1, window_bounds = array<i64: 256, 128>}, {pipeline_mode = #tpu.pipeline_mode<synchronous>, transform_indices = @transform_2, window_bounds = array<i64: 1, 128>}, {pipeline_mode = #tpu.pipeline_mode<synchronous>, transform_indices = @transform_3, window_bounds = array<i64: 128, 128>}, {pipeline_mode = #tpu.pipeline_mode<synchronous>, transform_indices = @transform_4, window_bounds = array<i64: 1, 128>}, {transform_indices = @transform_5, window_bounds = array<i64: 16, 128>}]} {
    %c16_i32 = arith.constant 16 : i32
    %0 = arith.muli %arg1, %c16_i32 : i32
    %c16_i32_0 = arith.constant 16 : i32
    %1 = arith.muli %arg0, %c16_i32_0 : i32
    %2 = arith.addi %0, %1 : i32
    %c128_i32 = arith.constant 128 : i32
    %3 = arith.muli %2, %c128_i32 : i32
    %4 = tpu.iota {dimensions = array<i32: 0>} : vector<16x128xi32>
    %5 = tpu.iota {dimensions = array<i32: 1>} : vector<16x128xi32>
    %c128_i32_1 = arith.constant 128 : i32
    %6 = vector.broadcast %c128_i32_1 : i32 to vector<16x128xi32>
    %7 = arith.muli %4, %6 : vector<16x128xi32>
    %8 = vector.broadcast %3 : i32 to vector<16x128xi32>
    %9 = arith.addi %8, %7 : vector<16x128xi32>
    %10 = arith.addi %9, %5 : vector<16x128xi32>
    %c0 = arith.constant 0 : index
    %11 = memref.load %arg2[%c0] : memref<1xi32, #tpu.memory_space<smem>>
    %c1640531527_i32 = arith.constant 1640531527 : i32
    %12 = arith.muli %11, %c1640531527_i32 : i32
    %13 = vector.broadcast %12 : i32 to vector<16x128xi32>
    %14 = arith.addi %10, %13 : vector<16x128xi32>
    %c16_i32_2 = arith.constant 16 : i32
    %15 = vector.broadcast %c16_i32_2 : i32 to vector<16x128xi32>
    %16 = arith.shrsi %14, %15 : vector<16x128xi32>
    %c65535_i32 = arith.constant 65535 : i32
    %17 = vector.broadcast %c65535_i32 : i32 to vector<16x128xi32>
    %18 = arith.andi %16, %17 : vector<16x128xi32>
    %19 = arith.xori %18, %14 : vector<16x128xi32>
    %c73244475_i32 = arith.constant 73244475 : i32
    %20 = vector.broadcast %c73244475_i32 : i32 to vector<16x128xi32>
    %21 = arith.muli %19, %20 : vector<16x128xi32>
    %c16_i32_3 = arith.constant 16 : i32
    %22 = vector.broadcast %c16_i32_3 : i32 to vector<16x128xi32>
    %23 = arith.shrsi %21, %22 : vector<16x128xi32>
    %c65535_i32_4 = arith.constant 65535 : i32
    %24 = vector.broadcast %c65535_i32_4 : i32 to vector<16x128xi32>
    %25 = arith.andi %23, %24 : vector<16x128xi32>
    %26 = arith.xori %25, %21 : vector<16x128xi32>
    %c73244475_i32_5 = arith.constant 73244475 : i32
    %27 = vector.broadcast %c73244475_i32_5 : i32 to vector<16x128xi32>
    %28 = arith.muli %26, %27 : vector<16x128xi32>
    %c16_i32_6 = arith.constant 16 : i32
    %29 = vector.broadcast %c16_i32_6 : i32 to vector<16x128xi32>
    %30 = arith.shrsi %28, %29 : vector<16x128xi32>
    %c65535_i32_7 = arith.constant 65535 : i32
    %31 = vector.broadcast %c65535_i32_7 : i32 to vector<16x128xi32>
    %32 = arith.andi %30, %31 : vector<16x128xi32>
    %33 = arith.xori %32, %28 : vector<16x128xi32>
    %c16777215_i32 = arith.constant 16777215 : i32
    %34 = vector.broadcast %c16777215_i32 : i32 to vector<16x128xi32>
    %35 = arith.andi %33, %34 : vector<16x128xi32>
    %36 = arith.sitofp %35 : vector<16x128xi32> to vector<16x128xf32>
    %cst = arith.constant 5.96046448E-8 : f32
    %37 = vector.broadcast %cst : f32 to vector<16x128xf32>
    %38 = arith.mulf %36, %37 : vector<16x128xf32>
    %c0_8 = arith.constant 0 : index
    %c0_9 = arith.constant 0 : index
    %39 = vector.load %arg3[%c0_8, %c0_9] : memref<16x128xbf16, #tpu.memory_space<vmem>>, vector<16x128xbf16>
    %40 = arith.truncf %38 : vector<16x128xf32> to vector<16x128xbf16>
    %41 = tpu.concatenate %39, %40 in 1 : vector<16x128xbf16>, vector<16x128xbf16> -> vector<16x256xbf16>
    %c0_10 = arith.constant 0 : index
    %c0_11 = arith.constant 0 : index
    %42 = vector.load %arg4[%c0_10, %c0_11] : memref<256x128xbf16, #tpu.memory_space<vmem>>, vector<256x128xbf16>
    %cst_12 = arith.constant dense<0.000000e+00> : vector<16x128xf32>
    %43 = tpu.matmul %41, %42, %cst_12 {dimension_numbers = #tpu.dot_dimension_numbers<[1], [0], [0], [1], [0, 0, 1, 1], [], []>} : vector<16x256xbf16>, vector<256x128xbf16>, vector<16x128xf32> -> vector<16x128xf32>
    %c0_13 = arith.constant 0 : index
    %c0_14 = arith.constant 0 : index
    %44 = vector.load %arg5[%c0_13, %c0_14] : memref<1x128xf32, #tpu.memory_space<vmem>>, vector<1x128xf32>
    %45 = vector.broadcast %44 : vector<1x128xf32> to vector<16x128xf32>
    %46 = arith.addf %43, %45 : vector<16x128xf32>
    %cst_15 = arith.constant 0.000000e+00 : f32
    %47 = vector.broadcast %cst_15 : f32 to vector<16x128xf32>
    %48 = arith.maximumf %46, %47 : vector<16x128xf32>
    %49 = arith.truncf %48 : vector<16x128xf32> to vector<16x128xbf16>
    %c0_16 = arith.constant 0 : index
    %c0_17 = arith.constant 0 : index
    %50 = vector.load %arg6[%c0_16, %c0_17] : memref<128x128xbf16, #tpu.memory_space<vmem>>, vector<128x128xbf16>
    %cst_18 = arith.constant dense<0.000000e+00> : vector<16x128xf32>
    %51 = tpu.matmul %49, %50, %cst_18 {dimension_numbers = #tpu.dot_dimension_numbers<[1], [0], [0], [1], [0, 0, 1, 1], [], []>} : vector<16x128xbf16>, vector<128x128xbf16>, vector<16x128xf32> -> vector<16x128xf32>
    %c0_19 = arith.constant 0 : index
    %c0_20 = arith.constant 0 : index
    %52 = vector.load %arg7[%c0_19, %c0_20] : memref<1x128xf32, #tpu.memory_space<vmem>>, vector<1x128xf32>
    %53 = vector.broadcast %52 : vector<1x128xf32> to vector<16x128xf32>
    %54 = arith.addf %51, %53 : vector<16x128xf32>
    %cst_21 = arith.constant 0.000000e+00 : f32
    %55 = vector.broadcast %cst_21 : f32 to vector<16x128xf32>
    %56 = arith.maximumf %54, %55 : vector<16x128xf32>
    %57 = arith.truncf %56 : vector<16x128xf32> to vector<16x128xbf16>
    %c0_22 = arith.constant 0 : index
    %c0_23 = arith.constant 0 : index
    %58 = vector.load %arg8[%c0_22, %c0_23] : memref<16x128xbf16, #tpu.memory_space<vmem>>, vector<16x128xbf16>
    tpu.vector_store %arg8[%c0_22, %c0_23], %57 {strides = array<i32>} : memref<16x128xbf16, #tpu.memory_space<vmem>>, vector<16x128xbf16>,
    return
  }
  func.func @transform_0(%arg0: i32, %arg1: i32, %arg2: memref<1xi32, #tpu.memory_space<smem>>) -> (i32, i32) {
    %c0_i32 = arith.constant 0 : i32
    %c0_i32_0 = arith.constant 0 : i32
    return %arg0, %c0_i32 : i32, i32
  }
  func.func @transform_1(%arg0: i32, %arg1: i32, %arg2: memref<1xi32, #tpu.memory_space<smem>>) -> (i32, i32) {
    %c0_i32 = arith.constant 0 : i32
    %c0_i32_0 = arith.constant 0 : i32
    %c0_i32_1 = arith.constant 0 : i32
    return %c0_i32, %c0_i32_0 : i32, i32
  }
  func.func @transform_2(%arg0: i32, %arg1: i32, %arg2: memref<1xi32, #tpu.memory_space<smem>>) -> (i32, i32) {
    %c0_i32 = arith.constant 0 : i32
    %c0_i32_0 = arith.constant 0 : i32
    %c0_i32_1 = arith.constant 0 : i32
    return %c0_i32, %c0_i32_0 : i32, i32
  }
  func.func @transform_3(%arg0: i32, %arg1: i32, %arg2: memref<1xi32, #tpu.memory_space<smem>>) -> (i32, i32) {
    %c0_i32 = arith.constant 0 : i32
    %c0_i32_0 = arith.constant 0 : i32
    %c0_i32_1 = arith.constant 0 : i32
    return %c0_i32, %c0_i32_0 : i32, i32
  }
  func.func @transform_4(%arg0: i32, %arg1: i32, %arg2: memref<1xi32, #tpu.memory_space<smem>>) -> (i32, i32) {
    %c0_i32 = arith.constant 0 : i32
    %c0_i32_0 = arith.constant 0 : i32
    %c0_i32_1 = arith.constant 0 : i32
    return %c0_i32, %c0_i32_0 : i32, i32
  }
  func.func @transform_5(%arg0: i32, %arg1: i32, %arg2: memref<1xi32, #tpu.memory_space<smem>>) -> (i32, i32) {
    %c1_i32 = arith.constant 1 : i32
    %0 = arith.muli %arg1, %c1_i32 : i32
    %1 = arith.addi %0, %arg0 : i32
    %c0_i32 = arith.constant 0 : i32
    %c0_i32_0 = arith.constant 0 : i32
    return %1, %c0_i32 : i32, i32
  }
}

</mosaic_0001>

<llo_original>
// kernel: hallucinator_forward.1
$region0: #{hallucinator_forward.1}
  #allocation0 [shape = 'u32[]', space=smem, size = 0x4, offset = 0x4, fixed_abs, tag = 'smem constant byte address 0x4 - core index']
  #allocation1 [shape = 'u32[144,128]{1,0:T(1,128)}', space=vmem, size = 0x12000, scoped, tag = 'internal scratch']
  #allocation2 [shape = 's32[1]{0}', space=sflag, size = 0x4, scoped, tag = 'scoped memory for hallucinator_forward.1']
  #allocation3 [shape = 's32[1]{0:T(128)S(6)}', space=smem, size = 0x200, scoped, tag = 'prefetched SMEM operand 0']
  %s0 = inlined_call_operand.<no memory space> [shape: s32[1], index: 0, kind: input, shape index: {}]
  %s1 = inlined_call_operand.vmem [shape: bf16[16,128], index: 1, kind: input, shape index: {}]
  %s2 = inlined_call_operand.vmem [shape: bf16[256,128], index: 2, kind: input, shape index: {}]
  %s3 = inlined_call_operand.vmem [shape: f32[1,128], index: 3, kind: input, shape index: {}]
  %s4 = inlined_call_operand.vmem [shape: bf16[128,128], index: 4, kind: input, shape index: {}]
  %s5 = inlined_call_operand.vmem [shape: f32[1,128], index: 5, kind: input, shape index: {}]
  %s6 = inlined_call_operand.hbm [shape: bf16[64,128], index: 6, kind: output, shape index: {}]
  %s7 = sld [smem:[#allocation0]]
  $region53: #{hallucinator_forward.1} parent=0
    _
  %s9 = ssub.s32 1, %s7
  %s10 = scalar_select 0, %s9, %s7
  %11 = sst [smem:[#allocation3]] %s0
  $region1: #{hallucinator_forward.1} parent=0
    #allocation4 [shape = 'u8[8192]{0}', space=vmem, size = 0x2000, scoped, tag = 'output window, operand 0']
    #allocation5 [shape = 's32[2]{0}', space=sflag, size = 0x8, scoped, tag = 'scoped memory for hallucinator_forward.1']
    %12 = vsyncpa [#allocation5], 0
    %s13 = scalar_lea.sflag [#allocation5], 1
    %14 = vsyncpa %s13, 0
    loop: start=0, step=1, limit=6
    $region2: #{hallucinator_forward.1} parent=1 // loop_pre_header
      _
    $region3: #{hallucinator_forward.1} parent=1 // loop_header
      %s16 = sphi 0, %s20
      %p17 = scmp.ge.s32.totalorder %s16, 6
      %s23 = sphi 0, %s35
      %s24 = sphi 0, %s31
      %s25 = sphi 0, %s23
      %s26 = sphi 0, %s24
      %s27 = sphi 0, %s25
      %s28 = sphi 0, %s26
      %s38 = sphi 0, %s40
      %s41 = sphi 0, %s38
      %s42 = sphi 0, %s41
      %s58 = sphi 0, %s42
      %s62 = sphi 0, %s62
      %s64 = sphi 0, %s62
      %s65 = sphi 0, %s64
      %s79 = sphi 0, %s65
      %s83 = sphi 0, %s83
      %s85 = sphi 0, %s83
      %s86 = sphi 0, %s85
      %s100 = sphi 0, %s86
      %s104 = sphi 0, %s104
      %s106 = sphi 0, %s104
      %s107 = sphi 0, %s106
      %s121 = sphi 0, %s107
      %s125 = sphi 0, %s125
      %s127 = sphi 0, %s125
      %s128 = sphi 0, %s127
      %s142 = sphi 0, %s128
      %s150 = sphi 0, %s152
      %s153 = sphi 0, %s150
      %s154 = sphi 0, %s153
      %s170 = sphi 0, %s154
    $region4: #{hallucinator_forward.1} parent=1 // loop_header_branch
      %19 = sbr.rel (%p17) target = $region8
    $region5: #{hallucinator_forward.1} parent=1 // loop_body
      %s21 = ssub.s32 %s16, 1
      %s22 = ssub.s32 %s16, 2
      %s29 = sadd.s32 1, %s24
      %p30 = scmp.ge.s32.totalorder %s29, 4
      %s31 = scalar_select %p30, 0, %s29
      %s32 = sadd.s32 1, %s23
      %s33 = scalar_select %p30, %s32, %s23
      %p34 = scmp.ge.s32.totalorder %s33, 1
      %s35 = scalar_select %p34, 0, %s33
      %s36 = ssub.s32 %s23, %s35
      %p37 = scmp.eq.s32.totalorder %s36, 0
      %s39 = sadd.s32 %s38, 1
      %s40 = scalar_select %p37, %s38, %s39
      %p43 = pneg %p37
      %p44 = scmp.eq.s32.totalorder %s16, 3
      %p45 = por %p43, %p44
      %p46 = scmp.ne.s32.totalorder %s38, %s41
      %p47 = scmp.eq.s32.totalorder %s16, 0
      %p48 = por %p46, %p47
      %p49 = scmp.ne.s32.totalorder %s38, %s41
      %p50 = scmp.eq.s32.totalorder %s21, 3
      %p51 = por %p49, %p50
      %p52 = scmp.ne.s32.totalorder %s41, %s42
      %p53 = scmp.eq.s32.totalorder %s21, 0
      %p54 = por %p52, %p53
      %p55 = scmp.ne.s32.totalorder %s41, %s42
      %p56 = scmp.eq.s32.totalorder %s22, 3
      %p57 = por %p55, %p56
      %p59 = scmp.ne.s32.totalorder %s42, %s58
      %p60 = scmp.eq.s32.totalorder %s22, 0
      %p61 = por %p59, %p60
      %s63 = sadd.s32 %s62, 1
      %p66 = scmp.eq.s32.totalorder %s16, 3
      %p67 = scmp.ne.s32.totalorder %s62, %s64
      %p68 = scmp.eq.s32.totalorder %s16, 0
      %p69 = por %p67, %p68
      %p70 = scmp.ne.s32.totalorder %s62, %s64
      %p71 = scmp.eq.s32.totalorder %s21, 3
      %p72 = por %p70, %p71
      %p73 = scmp.ne.s32.totalorder %s64, %s65
      %p74 = scmp.eq.s32.totalorder %s21, 0
      %p75 = por %p73, %p74
      %p76 = scmp.ne.s32.totalorder %s64, %s65
      %p77 = scmp.eq.s32.totalorder %s22, 3
      %p78 = por %p76, %p77
      %p80 = scmp.ne.s32.totalorder %s65, %s79
      %p81 = scmp.eq.s32.totalorder %s22, 0
      %p82 = por %p80, %p81
      %s84 = sadd.s32 %s83, 1
      %p87 = scmp.eq.s32.totalorder %s16, 3
      %p88 = scmp.ne.s32.totalorder %s83, %s85
      %p89 = scmp.eq.s32.totalorder %s16, 0
      %p90 = por %p88, %p89
      %p91 = scmp.ne.s32.totalorder %s83, %s85
      %p92 = scmp.eq.s32.totalorder %s21, 3
      %p93 = por %p91, %p92
      %p94 = scmp.ne.s32.totalorder %s85, %s86
      %p95 = scmp.eq.s32.totalorder %s21, 0
      %p96 = por %p94, %p95
      %p97 = scmp.ne.s32.totalorder %s85, %s86
      %p98 = scmp.eq.s32.totalorder %s22, 3
      %p99 = por %p97, %p98
      %p101 = scmp.ne.s32.totalorder %s86, %s100
      %p102 = scmp.eq.s32.totalorder %s22, 0
      %p103 = por %p101, %p102
      %s105 = sadd.s32 %s104, 1
      %p108 = scmp.eq.s32.totalorder %s16, 3
      %p109 = scmp.ne.s32.totalorder %s104, %s106
      %p110 = scmp.eq.s32.totalorder %s16, 0
      %p111 = por %p109, %p110
      %p112 = scmp.ne.s32.totalorder %s104, %s106
      %p113 = scmp.eq.s32.totalorder %s21, 3
      %p114 = por %p112, %p113
      %p115 = scmp.ne.s32.totalorder %s106, %s107
      %p116 = scmp.eq.s32.totalorder %s21, 0
      %p117 = por %p115, %p116
      %p118 = scmp.ne.s32.totalorder %s106, %s107
      %p119 = scmp.eq.s32.totalorder %s22, 3
      %p120 = por %p118, %p119
      %p122 = scmp.ne.s32.totalorder %s107, %s121
      %p123 = scmp.eq.s32.totalorder %s22, 0
      %p124 = por %p122, %p123
      %s126 = sadd.s32 %s125, 1
      %p129 = scmp.eq.s32.totalorder %s16, 3
      %p130 = scmp.ne.s32.totalorder %s125, %s127
      %p131 = scmp.eq.s32.totalorder %s16, 0
      %p132 = por %p130, %p131
      %p133 = scmp.ne.s32.totalorder %s125, %s127
      %p134 = scmp.eq.s32.totalorder %s21, 3
      %p135 = por %p133, %p134
      %p136 = scmp.ne.s32.totalorder %s127, %s128
      %p137 = scmp.eq.s32.totalorder %s21, 0
      %p138 = por %p136, %p137
      %p139 = scmp.ne.s32.totalorder %s127, %s128
      %p140 = scmp.eq.s32.totalorder %s22, 3
      %p141 = por %p139, %p140
      %p143 = scmp.ne.s32.totalorder %s128, %s142
      %p144 = scmp.eq.s32.totalorder %s22, 0
      %p145 = por %p143, %p144
      %s146 = sadd.s32 %s24, %s23
      %s147 = sadd.s32 %s31, %s35
      %s148 = ssub.s32 %s146, %s147
      %p149 = scmp.eq.s32.totalorder %s148, 0
      %s151 = sadd.s32 %s150, 1
      %s152 = scalar_select %p149, %s150, %s151
      %p155 = pneg %p149
      %p156 = scmp.eq.s32.totalorder %s16, 3
      %p157 = por %p155, %p156
      %p158 = scmp.ne.s32.totalorder %s150, %s153
      %p159 = scmp.eq.s32.totalorder %s16, 0
      %p160 = por %p158, %p159
      %p161 = scmp.ne.s32.totalorder %s150, %s153
      %p162 = scmp.eq.s32.totalorder %s21, 3
      %p163 = por %p161, %p162
      %p164 = scmp.ne.s32.totalorder %s153, %s154
      %p165 = scmp.eq.s32.totalorder %s21, 0
      %p166 = por %p164, %p165
      %p167 = scmp.ne.s32.totalorder %s153, %s154
      %p168 = scmp.eq.s32.totalorder %s22, 3
      %p169 = por %p167, %p168
      %p171 = scmp.ne.s32.totalorder %s154, %s170
      %p172 = scmp.eq.s32.totalorder %s22, 0
      %p173 = por %p171, %p172
      %p174 = scmp.le.s32.totalorder 1, %s16
      %p175 = scmp.lt.s32.totalorder %s16, 5
      %p176 = pnand %p174, %p175
      %p177 = pneg %p176
      // Predicated region
      $region9: #{hallucinator_forward.1} parent=5 // pred_check
        _
      $region10: #{hallucinator_forward.1} parent=5 // pred_check_branch
        %179 = sbr.rel (%p176) target = $region12
      $region11: #{hallucinator_forward.1} parent=5 // pred_region
        %s180 = ssub.s32 %s16, 1
        // Predicated region
        $region13: #{hallucinator_forward.1} parent=11 // pred_check
          %p181 = pneg %p54
        $region14: #{hallucinator_forward.1} parent=11 // pred_check_branch
          %183 = sbr.rel (%p181) target = $region16
        $region15: #{hallucinator_forward.1} parent=11 // pred_region
          %s184 = smul.u32 2, %s25
          %p185 = scmp.lt.s32.totalorder %s184, 1
          %s186 = scalar_select %p185, %s184, 1
          %s187 = smul.addr %s186, 4
          %s188 = scalar_lea.vmem %s1, %s187
          %s189 = smul.u32 2, %s25
        $region16: #{hallucinator_forward.1} parent=11 // pred_fallthru
          _
        // Predicated region
        $region17: #{hallucinator_forward.1} parent=11 // pred_check
          %p190 = pneg %p75
        $region18: #{hallucinator_forward.1} parent=11 // pred_check_branch
          %192 = sbr.rel (%p190) target = $region20
        $region19: #{hallucinator_forward.1} parent=11 // pred_region
          _
        $region20: #{hallucinator_forward.1} parent=11 // pred_fallthru
          _
        // Predicated region
        $region21: #{hallucinator_forward.1} parent=11 // pred_check
          %p193 = pneg %p96
        $region22: #{hallucinator_forward.1} parent=11 // pred_check_branch
          %195 = sbr.rel (%p193) target = $region24
        $region23: #{hallucinator_forward.1} parent=11 // pred_region
          _
        $region24: #{hallucinator_forward.1} parent=11 // pred_fallthru
          _
        // Predicated region
        $region25: #{hallucinator_forward.1} parent=11 // pred_check
          %p196 = pneg %p117
        $region26: #{hallucinator_forward.1} parent=11 // pred_check_branch
          %198 = sbr.rel (%p196) target = $region28
        $region27: #{hallucinator_forward.1} parent=11 // pred_region
          _
        $region28: #{hallucinator_forward.1} parent=11 // pred_fallthru
          _
        // Predicated region
        $region29: #{hallucinator_forward.1} parent=11 // pred_check
          %p199 = pneg %p138
        $region30: #{hallucinator_forward.1} parent=11 // pred_check_branch
          %201 = sbr.rel (%p199) target = $region32
        $region31: #{hallucinator_forward.1} parent=11 // pred_region
          _
        $region32: #{hallucinator_forward.1} parent=11 // pred_fallthru
          _
      $region12: #{hallucinator_forward.1} parent=5 // pred_fallthru
        _
      %p202 = scmp.lt.s32.totalorder %s16, 4
      // Predicated region
      $region33: #{hallucinator_forward.1} parent=5 // pred_check
        %p203 = pneg %p202
      $region34: #{hallucinator_forward.1} parent=5 // pred_check_branch
        %205 = sbr.rel (%p203) target = $region36
      $region35: #{hallucinator_forward.1} parent=5 // pred_region
        _
      $region36: #{hallucinator_forward.1} parent=5 // pred_fallthru
        _
      %p206 = scmp.le.s32.totalorder 1, %s16
      %p207 = scmp.lt.s32.totalorder %s16, 5
      %p208 = pnand %p206, %p207
      %p209 = pneg %p208
      // Predicated region
      $region37: #{hallucinator_forward.1} parent=5 // pred_check
        _
      $region38: #{hallucinator_forward.1} parent=5 // pred_check_branch
        %211 = sbr.rel (%p208) target = $region40
      $region39: #{hallucinator_forward.1} parent=5 // pred_region
        %s212 = ssub.s32 %s16, 1
        %s213 = smul.u32 2, %s25
        %p214 = scmp.lt.s32.totalorder %s213, 1
        %s215 = scalar_select %p214, %s213, 1
        %s216 = smul.addr %s215, 4
        %s217 = scalar_lea.vmem %s1, %s216
        %p218 = pneg %p54
        %p219 = pneg %p51
        %p220 = pneg %p75
        %p221 = pneg %p72
        %p222 = pneg %p96
        %p223 = pneg %p93
        %p224 = pneg %p117
        %p225 = pneg %p114
        %p226 = pneg %p138
        %p227 = pneg %p135
        %p228 = pneg %p166
        %p229 = pneg %p163
        %s230 = sand.u32 %s153, 1
        %s231 = scalar_lea.sflag [#allocation5], %s230
        %s232 = sand.u32 %s153, 1
        %s233 = smul.addr %s232, 8
        %s234 = scalar_lea.vmem [#allocation4], %s233
        %s235 = smul.u32 2, %s25
        %p236 = scmp.lt.s32.totalorder %s235, 1
        %s237 = scalar_select %p236, %s235, 1
        %s238 = smul.addr %s237, 4
        %s239 = scalar_lea.vmem %s1, %s238
        %s240 = smul.u32 2, %s25
        %s241 = sadd.s32 %s26, %s25
        %s242 = smul.u32 2, %s241
        %s244 = smul.u32 %s26, 16
        %s245 = smul.u32 %s25, 16
        %s246 = sadd.s32 %s244, %s245
        %s247 = smul.u32 %s246, 128
        %v248 = vlaneseq
        %v249 = vshrl.u32 %v248, 7
        %v250 = vadd.s32 %v249, 8
        %v251 = vlaneseq
        %v252 = vand.u32 %v251, 127
        %v253 = vmul.u32 %v249, 128
        %v254 = vmul.u32 %v250, 128
        %v255 = vstv %s247
        %v256 = vadd.s32 %v255, %v253
        %v257 = vadd.s32 %v255, %v254
        %v258 = vadd.s32 %v256, %v252
        %v259 = vadd.s32 %v257, %v252
        %s260 = sld [smem:[#allocation3]]
        %s261 = smul.u32 %s260, 1640531527
        %v262 = vstv %s261
        %v263 = vadd.s32 %v258, %v262
        %v264 = vadd.s32 %v259, %v262
        %v265 = vshra.s32 %v263, 16
        %v266 = vshra.s32 %v264, 16
        %v267 = vand.u32 %v265, 65535
        %v268 = vand.u32 %v266, 65535
        %v269 = vxor.u32 %v267, %v263
        %v270 = vxor.u32 %v268, %v264
        %v271 = vmul.u32 %v269, 73244475
        %v272 = vmul.u32 %v270, 73244475
        %v273 = vshra.s32 %v271, 16
        %v274 = vshra.s32 %v272, 16
        %v275 = vand.u32 %v273, 65535
        %v276 = vand.u32 %v274, 65535
        %v277 = vxor.u32 %v275, %v271
        %v278 = vxor.u32 %v276, %v272
        %v279 = vmul.u32 %v277, 73244475
        %v280 = vmul.u32 %v278, 73244475
        %v281 = vshra.s32 %v279, 16
        %v282 = vshra.s32 %v280, 16
        %v283 = vand.u32 %v281, 65535
        %v284 = vand.u32 %v282, 65535
        %v285 = vxor.u32 %v283, %v279
        %v286 = vxor.u32 %v284, %v280
        %v287 = vand.u32 %v285, 16777215
        %v288 = vand.u32 %v286, 16777215
        %v289 = vcvt.s32.f32 %v287
        %v290 = vcvt.s32.f32 %v288
        %v291 = vmul.f32 %v289, 5.9604645e-08
        %v292 = vmul.f32 %v290, 5.9604645e-08
        %v293 = vld [vmem:[%s239] sm:$0xf]
        %v294 = vld [vmem:[%s239 + $0x4] sm:$0xf]
        %v295 = vpack.c.bf16 %v292, %v291
        %v298 = vunpack.c.l.b16 %v293
        %v299 = vunpack.c.l.b16 %v294
        %v300 = vpack.c.b16 %v299, %v298
        %v302 = vld [vmem:[%s2] sm:$0xf]
        %v303 = vld [vmem:[%s2 + $0x4] sm:$0xf]
        %v304 = vld [vmem:[%s2 + $0x8] sm:$0xf]
        %v305 = vld [vmem:[%s2 + $0xc] sm:$0xf]
        %v306 = vld [vmem:[%s2 + $0x10] sm:$0xf]
        %v307 = vld [vmem:[%s2 + $0x14] sm:$0xf]
        %v308 = vld [vmem:[%s2 + $0x18] sm:$0xf]
        %v309 = vld [vmem:[%s2 + $0x1c] sm:$0xf]
        %v310 = vld [vmem:[%s2 + $0x20] sm:$0xf]
        %v311 = vld [vmem:[%s2 + $0x24] sm:$0xf]
        %v312 = vld [vmem:[%s2 + $0x28] sm:$0xf]
        %v313 = vld [vmem:[%s2 + $0x2c] sm:$0xf]
        %v314 = vld [vmem:[%s2 + $0x30] sm:$0xf]
        %v315 = vld [vmem:[%s2 + $0x34] sm:$0xf]
        %v316 = vld [vmem:[%s2 + $0x38] sm:$0xf]
        %v317 = vld [vmem:[%s2 + $0x3c] sm:$0xf]
        %v318 = vld [vmem:[%s2 + $0x40] sm:$0xf]
        %v319 = vld [vmem:[%s2 + $0x44] sm:$0xf]
        %v320 = vld [vmem:[%s2 + $0x48] sm:$0xf]
        %v321 = vld [vmem:[%s2 + $0x4c] sm:$0xf]
        %v322 = vld [vmem:[%s2 + $0x50] sm:$0xf]
        %v323 = vld [vmem:[%s2 + $0x54] sm:$0xf]
        %v324 = vld [vmem:[%s2 + $0x58] sm:$0xf]
        %v325 = vld [vmem:[%s2 + $0x5c] sm:$0xf]
        %v326 = vld [vmem:[%s2 + $0x60] sm:$0xf]
        %v327 = vld [vmem:[%s2 + $0x64] sm:$0xf]
        %v328 = vld [vmem:[%s2 + $0x68] sm:$0xf]
        %v329 = vld [vmem:[%s2 + $0x6c] sm:$0xf]
        %v330 = vld [vmem:[%s2 + $0x70] sm:$0xf]
        %v331 = vld [vmem:[%s2 + $0x74] sm:$0xf]
        %v332 = vld [vmem:[%s2 + $0x78] sm:$0xf]
        %v333 = vld [vmem:[%s2 + $0x7c] sm:$0xf]
        %v334 = vld [vmem:[%s3] sm:$0x1]
        %v336 = vlaneseq
        %v337 = vshrl.u32 %v336, 7
        %v338 = vsub.s32 0, %v337
        %v339 = vrot.slane %v334, %v338
        %v373 = vunpack.c.l.b16 %v302
        %v374 = vunpack.c.l.b16 %v303
        %v375 = vunpack.c.l.b16 %v304
        %v376 = vunpack.c.l.b16 %v305
        %v377 = vunpack.c.l.b16 %v306
        %v378 = vunpack.c.l.b16 %v307
        %v379 = vunpack.c.l.b16 %v308
        %v380 = vunpack.c.l.b16 %v309
        %v381 = vunpack.c.l.b16 %v310
        %v382 = vunpack.c.l.b16 %v311
        %v383 = vunpack.c.l.b16 %v312
        %v384 = vunpack.c.l.b16 %v313
        %v385 = vunpack.c.l.b16 %v314
        %v386 = vunpack.c.l.b16 %v315
        %v387 = vunpack.c.l.b16 %v316
        %v388 = vunpack.c.l.b16 %v317
        %v389 = vunpack.c.l.b16 %v318
        %v390 = vunpack.c.l.b16 %v319
        %v391 = vunpack.c.l.b16 %v320
        %v392 = vunpack.c.l.b16 %v321
        %v393 = vunpack.c.l.b16 %v322
        %v394 = vunpack.c.l.b16 %v323
        %v395 = vunpack.c.l.b16 %v324
        %v396 = vunpack.c.l.b16 %v325
        %v397 = vunpack.c.l.b16 %v326
        %v398 = vunpack.c.l.b16 %v327
        %v399 = vunpack.c.l.b16 %v328
        %v400 = vunpack.c.l.b16 %v329
        %v401 = vunpack.c.l.b16 %v330
        %v402 = vunpack.c.l.b16 %v331
        %v403 = vunpack.c.l.b16 %v332
        %v404 = vunpack.c.l.b16 %v333
        %v405 = vpack.c.b16 %v374, %v373
        %v406 = vpack.c.b16 %v376, %v375
        %v407 = vpack.c.b16 %v378, %v377
        %v408 = vpack.c.b16 %v380, %v379
        %v409 = vpack.c.b16 %v382, %v381
        %v410 = vpack.c.b16 %v384, %v383
        %v411 = vpack.c.b16 %v386, %v385
        %v412 = vpack.c.b16 %v388, %v387
        %v413 = vpack.c.b16 %v390, %v389
        %v414 = vpack.c.b16 %v392, %v391
        %v415 = vpack.c.b16 %v394, %v393
        %v416 = vpack.c.b16 %v396, %v395
        %v417 = vpack.c.b16 %v398, %v397
        %v418 = vpack.c.b16 %v400, %v399
        %v419 = vpack.c.b16 %v402, %v401
        %v420 = vpack.c.b16 %v404, %v403
        %437 = vmatprep.subr.bf16.mxu0 0
        %438 = vmatpush1.bf16.msra.mxu0 %v412
        %439 = vmatprep.subr.bf16.mxu0 0
        %440 = vmatpush1.bf16.msra.mxu0 %v411
        %441 = vmatprep.subr.bf16.mxu0 0
        %442 = vmatpush1.bf16.msra.mxu0 %v410
        %443 = vmatprep.subr.bf16.mxu0 0
        %444 = vmatpush1.bf16.msra.mxu0 %v409
        %445 = vmatprep.subr.bf16.mxu0 0
        %446 = vmatpush1.bf16.msra.mxu0 %v408
        %447 = vmatprep.subr.bf16.mxu0 0
        %448 = vmatpush1.bf16.msra.mxu0 %v407
        %449 = vmatprep.subr.bf16.mxu0 0
        %450 = vmatpush1.bf16.msra.mxu0 %v406
        %451 = vmatprep.subr.bf16.mxu0 0
        %452 = vmatpush1.bf16.msra.mxu0 %v405
        %453 = vmatprep.subr.bf16.mxu0 0
        %454 = vmatpush2.bf16.msra.mxu0 %v420
        %455 = vmatprep.subr.bf16.mxu0 0
        %456 = vmatpush2.bf16.msra.mxu0 %v419
        %457 = vmatprep.subr.bf16.mxu0 0
        %458 = vmatpush2.bf16.msra.mxu0 %v418
        %459 = vmatprep.subr.bf16.mxu0 0
        %460 = vmatpush2.bf16.msra.mxu0 %v417
        %461 = vmatprep.subr.bf16.mxu0 0
        %462 = vmatpush2.bf16.msra.mxu0 %v416
        %463 = vmatprep.subr.bf16.mxu0 0
        %464 = vmatpush2.bf16.msra.mxu0 %v415
        %465 = vmatprep.subr.bf16.mxu0 0
        %466 = vmatpush2.bf16.msra.mxu0 %v414
        %467 = vmatprep.subr.bf16.mxu0 0
        %468 = vmatpush2.bf16.msra.mxu0 %v413
        %469 = vmatprep.mubr.bf16.mxu0 %v295
        %470 = vmatmul.mubr.bf16.gmra.mxu0 %v300
        %v471 = vpop.f32.mrf.mxu0
        %v472 = vadd.f32 %v339, %v471
        %v473 = vpop.f32.mrf.mxu0
        %v474 = vpop.f32.mrf.mxu0
        %v475 = vadd.f32 %v339, %v474
        %v476 = vpop.f32.mrf.mxu0
        %477 = vdwg.mxu0
        %v478 = vmax.f32 %v472, 0.0
        %v479 = vmax.f32 %v475, 0.0
        %v480 = vpack.c.bf16 %v479, %v478
        %v481 = vld [vmem:[%s4] sm:$0xf]
        %v482 = vld [vmem:[%s4 + $0x4] sm:$0xf]
        %v483 = vld [vmem:[%s4 + $0x8] sm:$0xf]
        %v484 = vld [vmem:[%s4 + $0xc] sm:$0xf]
        %v485 = vld [vmem:[%s4 + $0x10] sm:$0xf]
        %v486 = vld [vmem:[%s4 + $0x14] sm:$0xf]
        %v487 = vld [vmem:[%s4 + $0x18] sm:$0xf]
        %v488 = vld [vmem:[%s4 + $0x1c] sm:$0xf]
        %v489 = vld [vmem:[%s4 + $0x20] sm:$0xf]
        %v490 = vld [vmem:[%s4 + $0x24] sm:$0xf]
        %v491 = vld [vmem:[%s4 + $0x28] sm:$0xf]
        %v492 = vld [vmem:[%s4 + $0x2c] sm:$0xf]
        %v493 = vld [vmem:[%s4 + $0x30] sm:$0xf]
        %v494 = vld [vmem:[%s4 + $0x34] sm:$0xf]
        %v495 = vld [vmem:[%s4 + $0x38] sm:$0xf]
        %v496 = vld [vmem:[%s4 + $0x3c] sm:$0xf]
        %v497 = vld [vmem:[%s5] sm:$0x1]
        %v499 = vlaneseq
        %v500 = vshrl.u32 %v499, 7
        %v501 = vsub.s32 0, %v500
        %v502 = vrot.slane %v497, %v501
        %v520 = vunpack.c.l.b16 %v481
        %v521 = vunpack.c.l.b16 %v482
        %v522 = vunpack.c.l.b16 %v483
        %v523 = vunpack.c.l.b16 %v484
        %v524 = vunpack.c.l.b16 %v485
        %v525 = vunpack.c.l.b16 %v486
        %v526 = vunpack.c.l.b16 %v487
        %v527 = vunpack.c.l.b16 %v488
        %v528 = vunpack.c.l.b16 %v489
        %v529 = vunpack.c.l.b16 %v490
        %v530 = vunpack.c.l.b16 %v491
        %v531 = vunpack.c.l.b16 %v492
        %v532 = vunpack.c.l.b16 %v493
        %v533 = vunpack.c.l.b16 %v494
        %v534 = vunpack.c.l.b16 %v495
        %v535 = vunpack.c.l.b16 %v496
        %v536 = vpack.c.b16 %v521, %v520
        %v537 = vpack.c.b16 %v523, %v522
        %v538 = vpack.c.b16 %v525, %v524
        %v539 = vpack.c.b16 %v527, %v526
        %v540 = vpack.c.b16 %v529, %v528
        %v541 = vpack.c.b16 %v531, %v530
        %v542 = vpack.c.b16 %v533, %v532
        %v543 = vpack.c.b16 %v535, %v534
        %552 = vmatprep.subr.bf16.mxu0 0
        %553 = vmatpush1.bf16.msra.mxu0 %v543
        %554 = vmatprep.subr.bf16.mxu0 0
        %555 = vmatpush1.bf16.msra.mxu0 %v542
        %556 = vmatprep.subr.bf16.mxu0 0
        %557 = vmatpush1.bf16.msra.mxu0 %v541
        %558 = vmatprep.subr.bf16.mxu0 0
        %559 = vmatpush1.bf16.msra.mxu0 %v540
        %560 = vmatprep.subr.bf16.mxu0 0
        %561 = vmatpush1.bf16.msra.mxu0 %v539
        %562 = vmatprep.subr.bf16.mxu0 0
        %563 = vmatpush1.bf16.msra.mxu0 %v538
        %564 = vmatprep.subr.bf16.mxu0 0
        %565 = vmatpush1.bf16.msra.mxu0 %v537
        %566 = vmatprep.subr.bf16.mxu0 0
        %567 = vmatpush1.bf16.msra.mxu0 %v536
        %568 = vmatprep.subr.bf16.mxu0 0
        %569 = vmatpush2.bf16.msra.mxu0 0
        %570 = vmatprep.subr.bf16.mxu0 0
        %571 = vmatpush2.bf16.msra.mxu0 0
        %572 = vmatprep.subr.bf16.mxu0 0
        %573 = vmatpush2.bf16.msra.mxu0 0
        %574 = vmatprep.subr.bf16.mxu0 0
        %575 = vmatpush2.bf16.msra.mxu0 0
        %576 = vmatprep.subr.bf16.mxu0 0
        %577 = vmatpush2.bf16.msra.mxu0 0
        %578 = vmatprep.subr.bf16.mxu0 0
        %579 = vmatpush2.bf16.msra.mxu0 0
        %580 = vmatprep.subr.bf16.mxu0 0
        %581 = vmatpush2.bf16.msra.mxu0 0
        %582 = vmatprep.subr.bf16.mxu0 0
        %583 = vmatpush2.bf16.msra.mxu0 0
        %584 = vmatprep.mubr.bf16.mxu0 0
        %585 = vmatmul.mubr.bf16.gmra.mxu0 %v480
        %v586 = vpop.f32.mrf.mxu0
        %v587 = vadd.f32 %v502, %v586
        %v588 = vpop.f32.mrf.mxu0
        %v589 = vpop.f32.mrf.mxu0
        %v590 = vadd.f32 %v502, %v589
        %v591 = vpop.f32.mrf.mxu0
        %592 = vdwg.mxu0
        %v593 = vmax.f32 %v587, 0.0
        %v594 = vmax.f32 %v590, 0.0
        %v595 = vpack.c.bf16 %v594, %v593
        %v597 = vunpack.c.l.b16 %v595
        %v598 = vunpack.c.h.b16 %v595
        %v599 = vpack.c.b16 %v597, %v597
        %v600 = vpack.c.b16 %v598, %v598
        %603 = vst [vmem:[%s234] sm:$0xf] %v599
        %604 = vst [vmem:[%s234 + $0x4] sm:$0xf] %v600
        %s605 = sand.u32 %s153, 1
        %s606 = scalar_lea.sflag [#allocation5], %s605
        %s607 = sand.u32 %s153, 1
        %s608 = smul.addr %s607, 8
        %s609 = scalar_lea.vmem [#allocation4], %s608
        // Predicated region
        $region41: #{hallucinator_forward.1} parent=39 // pred_check
          %p610 = pneg %p163
        $region42: #{hallucinator_forward.1} parent=39 // pred_check_branch
          %612 = sbr.rel (%p610) target = $region44
        $region43: #{hallucinator_forward.1} parent=39 // pred_region
          %s613 = sadd.s32 %s26, %s25
          %s614 = smul.u32 2, %s613
          %s616 = ssub.s32 128, 128
          %617 = vsyncadd %s606, %s616
          %s618 = smul.addr %s614, 64
          %s619 = scalar_lea.hbm %s6, %s618
          %s620 = sshll.u32 %s609, 4
          %s621 = int_to_ptr.vmem [resolvable:$true] %s620
          %626 = dma.vmem_to_hbm [thread:$0]  %s621, 128, %s619, %s606, 64, 64, 4
        $region44: #{hallucinator_forward.1} parent=39 // pred_fallthru
          _
      $region40: #{hallucinator_forward.1} parent=5 // pred_fallthru
        _
      %p627 = scmp.le.s32.totalorder 2, %s16
      // Predicated region
      $region45: #{hallucinator_forward.1} parent=5 // pred_check
        %p628 = pneg %p627
      $region46: #{hallucinator_forward.1} parent=5 // pred_check_branch
        %630 = sbr.rel (%p628) target = $region48
      $region47: #{hallucinator_forward.1} parent=5 // pred_region
        %s631 = ssub.s32 %s16, 2
        // Predicated region
        $region49: #{hallucinator_forward.1} parent=47 // pred_check
          %p632 = pneg %p169
        $region50: #{hallucinator_forward.1} parent=47 // pred_check_branch
          %634 = sbr.rel (%p632) target = $region52
        $region51: #{hallucinator_forward.1} parent=47 // pred_region
          %s635 = sand.u32 %s154, 1
          %s636 = scalar_lea.sflag [#allocation5], %s635
          %s637 = sand.u32 %s154, 1
          %s638 = smul.addr %s637, 8
          %s639 = scalar_lea.vmem [#allocation4], %s638
          %640 = dma.done %s636, 128
        $region52: #{hallucinator_forward.1} parent=47 // pred_fallthru
          _
      $region48: #{hallucinator_forward.1} parent=5 // pred_fallthru
        _
    $region6: #{hallucinator_forward.1} parent=1 // loop_footer
      %s20 = sadd.s32 1, %s16
    $region7: #{hallucinator_forward.1} parent=1 // loop_footer_branch
      %15 = sbr.rel target = $region3
    $region8: #{hallucinator_forward.1} parent=1 // loop_exit
      _
    %641 = vsyncpa [#allocation5], 1
    %s642 = scalar_lea.sflag [#allocation5], 1
    %643 = vsyncpa %s642, 1

</llo_original>
